<compile_context>
chip_gen: v5e
topology: v5e:2x2
jax: 0.10.0
libtpu: 0.0.40
codegen_flags: <defaults>
</compile_context>

<pallas_src>
import functools

import jax
import jax.numpy as jnp
from jax.experimental import pallas as pl
from jax.experimental.pallas import tpu as pltpu

_LANE = 128          # vreg lane width (last dim)
_SUBLANE_BF16 = 16   # sublane packing for bf16 (second-to-last dim)


def _round_up(n, m):
    return (n + m - 1) // m * m


def _fused_mlp_kernel(*refs, num_layers):
    """refs = (x_ref, w0, b0, w1, b1, ..., o_ref); everything VMEM-resident."""
    x_ref, o_ref = refs[0], refs[-1]
    h = x_ref[...]                                    # bf16 (Bp, K0p)
    for i in range(num_layers):                       # unrolled at trace time
        w_ref = refs[1 + 2 * i]
        b_ref = refs[2 + 2 * i]
        # bf16 x bf16 matmul on the MXU with f32 accumulation.
        acc = jnp.dot(h, w_ref[...], preferred_element_type=jnp.float32)
        acc = acc + b_ref[...]                        # (Bp, Np) + (1, Np), f32
        if i < num_layers - 1:
            acc = jnp.maximum(acc, 0.0)               # ReLU
            h = acc.astype(jnp.bfloat16)              # feed next MXU pass
        else:
            o_ref[...] = acc.astype(o_ref.dtype)      # lane-dense f32 store


def _fused_mlp_call(batch_p, pad_feats):
    num_layers = len(pad_feats) - 1
    kernel = functools.partial(_fused_mlp_kernel, num_layers=num_layers)
    in_specs = [pl.BlockSpec((batch_p, pad_feats[0]), lambda: (0, 0))]
    for i in range(num_layers):
        in_specs.append(
            pl.BlockSpec((pad_feats[i], pad_feats[i + 1]), lambda: (0, 0)))
        in_specs.append(pl.BlockSpec((1, pad_feats[i + 1]), lambda: (0, 0)))
    return pl.pallas_call(
        kernel,
        out_shape=jax.ShapeDtypeStruct((batch_p, pad_feats[-1]), jnp.float32),
        in_specs=in_specs,
        out_specs=pl.BlockSpec((batch_p, pad_feats[-1]), lambda: (0, 0)),
        # Tiny problem: everything (few hundred KiB) fits comfortably under
        # the default scoped VMEM limit on v5e/v6e/v7x; state it explicitly.
        compiler_params=pltpu.CompilerParams(vmem_limit_bytes=32 * 1024 * 1024),
    )


def pad_params(params):
    """Zero-pad (w, b) to 128-lane multiples; weights cast to bf16.

    params: list of (w: (Din, Dout) f32, b: (Dout,) f32) -- w is stored
    transposed relative to PyTorch's nn.Linear (out, in) layout.
    """
    padded = []
    for w, b in params:
        din, dout = w.shape
        kp, npad = _round_up(din, _LANE), _round_up(dout, _LANE)
        w_p = jnp.zeros((kp, npad), jnp.bfloat16)
        w_p = w_p.at[:din, :dout].set(w.astype(jnp.bfloat16))
        b_p = jnp.zeros((1, npad), jnp.float32)
        b_p = b_p.at[:, :dout].set(b.reshape(1, dout).astype(jnp.float32))
        padded.append((w_p, b_p))
    return padded


def make_mlp_forward(feats):
    """Returns a jitted forward(x, padded_params) for an MLP with `feats`."""
    pad_feats = [_round_up(f, _LANE) for f in feats]
    in_dim, out_dim = feats[0], feats[-1]

    def forward(x, padded_params):
        batch = x.shape[0]
        batch_p = _round_up(batch, _SUBLANE_BF16)
        x_p = jnp.zeros((batch_p, pad_feats[0]), jnp.bfloat16)
        x_p = x_p.at[:batch, :in_dim].set(x.astype(jnp.bfloat16))
        flat = [x_p]
        for w_p, b_p in padded_params:
            flat.extend((w_p, b_p))
        out_p = _fused_mlp_call(batch_p, pad_feats)(*flat)
        return out_p[:batch, :out_dim]

    return jax.jit(forward)


def init_params(key, feats):
    """Synthetic nn.Linear-style init; weight stored transposed as (in, out)."""
    params = []
    for din, dout in zip(feats[:-1], feats[1:]):
        key, kw, kb = jax.random.split(key, 3)
        bound = 1.0 / jnp.sqrt(din)
        w = jax.random.uniform(kw, (din, dout), jnp.float32, -bound, bound)
        b = jax.random.uniform(kb, (dout,), jnp.float32, -bound, bound)
        params.append((w, b))
    return params


def mlp_reference_f32(x, params):
    """Pure-JAX f32 reference of the PyTorch forward pass."""
    n = len(params)
    for i, (w, b) in enumerate(params):
        x = x @ w + b
        if i < n - 1:
            x = jnp.maximum(x, 0.0)
    return x


def mlp_reference_bf16(x, params):
    """Reference with matching bf16-operand / f32-accumulate numerics."""
    h = x
    n = len(params)
    for i, (w, b) in enumerate(params):
        h = jnp.dot(h.astype(jnp.bfloat16), w.astype(jnp.bfloat16),
                    preferred_element_type=jnp.float32) + b
        if i < n - 1:
            h = jnp.maximum(h, 0.0)
    return h


if __name__ == "__main__":
    # MLP(feats=[32, 64, 48, 16], nonlinear=ReLU), batch of 8.
    feats = [32, 64, 48, 16]
    batch = 8

    key = jax.random.PRNGKey(0)
    key, kx = jax.random.split(key)
    x = jax.random.normal(kx, (batch, feats[0]), jnp.float32)
    params = init_params(key, feats)

    padded_params = pad_params(params)   # pad + cast once, reuse every call
    forward = make_mlp_forward(feats)

    out = forward(x, padded_params)
    out = jax.block_until_ready(out)
    assert out.shape == (batch, feats[-1])

    # Check against a reference with the same bf16-operand numerics ...
    ref16 = mlp_reference_bf16(x, params)
    assert jnp.allclose(out, ref16, atol=2e-2, rtol=2e-2), \
        float(jnp.max(jnp.abs(out - ref16)))
    # ... and (loosely) against the full-f32 reference.
    ref32 = mlp_reference_f32(x, params)
    assert jnp.allclose(out, ref32, atol=1e-1, rtol=1e-1), \
        float(jnp.max(jnp.abs(out - ref32)))

    print("KERNEL_OK")
</pallas_src>

<mosaic_0001>
module attributes {stable_mosaic.version = 11 : i64} {
  func.func @_fused_mlp_kernel(%arg0: memref<16x128xbf16, #tpu.memory_space<vmem>>, %arg1: memref<128x128xbf16, #tpu.memory_space<vmem>>, %arg2: memref<1x128xf32, #tpu.memory_space<vmem>>, %arg3: memref<128x128xbf16, #tpu.memory_space<vmem>>, %arg4: memref<1x128xf32, #tpu.memory_space<vmem>>, %arg5: memref<128x128xbf16, #tpu.memory_space<vmem>>, %arg6: memref<1x128xf32, #tpu.memory_space<vmem>>, %arg7: memref<16x128xf32, #tpu.memory_space<vmem>>) attributes {dimension_semantics = [], scalar_prefetch = 0 : i64, scratch_operands = 0 : i64, tpu.core_type = #tpu.core_type<tc>} {
    %c0 = arith.constant 0 : index
    %c0_0 = arith.constant 0 : index
    %0 = vector.load %arg0[%c0, %c0_0] : memref<16x128xbf16, #tpu.memory_space<vmem>>, vector<16x128xbf16>
    %c0_1 = arith.constant 0 : index
    %c0_2 = arith.constant 0 : index
    %1 = vector.load %arg1[%c0_1, %c0_2] : memref<128x128xbf16, #tpu.memory_space<vmem>>, vector<128x128xbf16>
    %cst = arith.constant dense<0.000000e+00> : vector<16x128xf32>
    %2 = tpu.matmul %0, %1, %cst {dimension_numbers = #tpu.dot_dimension_numbers<[1], [0], [0], [1], [0, 0, 1, 1], [], []>} : vector<16x128xbf16>, vector<128x128xbf16>, vector<16x128xf32> -> vector<16x128xf32>
    %c0_3 = arith.constant 0 : index
    %c0_4 = arith.constant 0 : index
    %3 = vector.load %arg2[%c0_3, %c0_4] : memref<1x128xf32, #tpu.memory_space<vmem>>, vector<1x128xf32>
    %4 = vector.broadcast %3 : vector<1x128xf32> to vector<16x128xf32>
    %5 = arith.addf %2, %4 : vector<16x128xf32>
    %cst_5 = arith.constant 0.000000e+00 : f32
    %6 = vector.broadcast %cst_5 : f32 to vector<16x128xf32>
    %7 = arith.maximumf %5, %6 : vector<16x128xf32>
    %8 = arith.truncf %7 : vector<16x128xf32> to vector<16x128xbf16>
    %c0_6 = arith.constant 0 : index
    %c0_7 = arith.constant 0 : index
    %9 = vector.load %arg3[%c0_6, %c0_7] : memref<128x128xbf16, #tpu.memory_space<vmem>>, vector<128x128xbf16>
    %cst_8 = arith.constant dense<0.000000e+00> : vector<16x128xf32>
    %10 = tpu.matmul %8, %9, %cst_8 {dimension_numbers = #tpu.dot_dimension_numbers<[1], [0], [0], [1], [0, 0, 1, 1], [], []>} : vector<16x128xbf16>, vector<128x128xbf16>, vector<16x128xf32> -> vector<16x128xf32>
    %c0_9 = arith.constant 0 : index
    %c0_10 = arith.constant 0 : index
    %11 = vector.load %arg4[%c0_9, %c0_10] : memref<1x128xf32, #tpu.memory_space<vmem>>, vector<1x128xf32>
    %12 = vector.broadcast %11 : vector<1x128xf32> to vector<16x128xf32>
    %13 = arith.addf %10, %12 : vector<16x128xf32>
    %cst_11 = arith.constant 0.000000e+00 : f32
    %14 = vector.broadcast %cst_11 : f32 to vector<16x128xf32>
    %15 = arith.maximumf %13, %14 : vector<16x128xf32>
    %16 = arith.truncf %15 : vector<16x128xf32> to vector<16x128xbf16>
    %c0_12 = arith.constant 0 : index
    %c0_13 = arith.constant 0 : index
    %17 = vector.load %arg5[%c0_12, %c0_13] : memref<128x128xbf16, #tpu.memory_space<vmem>>, vector<128x128xbf16>
    %cst_14 = arith.constant dense<0.000000e+00> : vector<16x128xf32>
    %18 = tpu.matmul %16, %17, %cst_14 {dimension_numbers = #tpu.dot_dimension_numbers<[1], [0], [0], [1], [0, 0, 1, 1], [], []>} : vector<16x128xbf16>, vector<128x128xbf16>, vector<16x128xf32> -> vector<16x128xf32>
    %c0_15 = arith.constant 0 : index
    %c0_16 = arith.constant 0 : index
    %19 = vector.load %arg6[%c0_15, %c0_16] : memref<1x128xf32, #tpu.memory_space<vmem>>, vector<1x128xf32>
    %20 = vector.broadcast %19 : vector<1x128xf32> to vector<16x128xf32>
    %21 = arith.addf %18, %20 : vector<16x128xf32>
    %c0_17 = arith.constant 0 : index
    %c0_18 = arith.constant 0 : index
    %22 = vector.load %arg7[%c0_17, %c0_18] : memref<16x128xf32, #tpu.memory_space<vmem>>, vector<16x128xf32>
    tpu.vector_store %arg7[%c0_17, %c0_18], %21 {strides = array<i32>} : memref<16x128xf32, #tpu.memory_space<vmem>>, vector<16x128xf32>,
    return
  }
}

</mosaic_0001>

<llo_original>
// kernel: forward.1
$region0: #{forward.1}
  #allocation0 [shape = 'u32[]', space=smem, size = 0x4, offset = 0x4, fixed_abs, tag = 'smem constant byte address 0x4 - core index']
  #allocation1 [shape = 'u32[72,128]{1,0:T(1,128)}', space=vmem, size = 0x9000, scoped, tag = 'internal scratch']
  %s0 = inlined_call_operand.vmem [shape: bf16[16,128], index: 0, kind: input, shape index: {}]
  %s1 = inlined_call_operand.hbm [shape: bf16[128,128], index: 1, kind: input, shape index: {}]
  %s2 = inlined_call_operand.vmem [shape: f32[1,128], index: 2, kind: input, shape index: {}]
  %s3 = inlined_call_operand.hbm [shape: bf16[128,128], index: 3, kind: input, shape index: {}]
  %s4 = inlined_call_operand.vmem [shape: f32[1,128], index: 4, kind: input, shape index: {}]
  %s5 = inlined_call_operand.hbm [shape: bf16[128,128], index: 5, kind: input, shape index: {}]
  %s6 = inlined_call_operand.vmem [shape: f32[1,128], index: 6, kind: input, shape index: {}]
  %s7 = inlined_call_operand.vmem [shape: f32[16,128], index: 7, kind: output, shape index: {}]
  %s8 = sld [smem:[#allocation0]]
  $region50: #{forward.1} parent=0
    _
  %s10 = ssub.s32 1, %s8
  %s11 = scalar_select 0, %s10, %s8
  $region1: #{forward.1} parent=0
    #allocation2 [shape = 'u8[32768]{0}', space=vmem, size = 0x8000, scoped, tag = 'input window, operand 1, single buffered']
    #allocation3 [shape = 's32[1]{0}', space=sflag, size = 0x4, scoped, tag = 'scoped memory for forward.1']
    #allocation4 [shape = 'u8[32768]{0}', space=vmem, size = 0x8000, scoped, tag = 'input window, operand 3, single buffered']
    #allocation5 [shape = 's32[1]{0}', space=sflag, size = 0x4, scoped, tag = 'scoped memory for forward.1']
    #allocation6 [shape = 'u8[32768]{0}', space=vmem, size = 0x8000, scoped, tag = 'input window, operand 5, single buffered']
    %12 = vsyncpa [#allocation3], 0
    %13 = vsyncpa [#allocation5], 0
    // Predicated region
    $region2: #{forward.1} parent=1 // pred_check
      _
    $region3: #{forward.1} parent=1 // pred_check_branch
      %15 = sbr.rel (0) target = $region5
    $region4: #{forward.1} parent=1 // pred_region
      _
    $region5: #{forward.1} parent=1 // pred_fallthru
      _
    // Predicated region
    $region6: #{forward.1} parent=1 // pred_check
      _
    $region7: #{forward.1} parent=1 // pred_check_branch
      %17 = sbr.rel (0) target = $region9
    $region8: #{forward.1} parent=1 // pred_region
      %19 = vsyncadd [#allocation3], 0
      %s20 = sshll.u32 %s1, 4
      %s21 = int_to_ptr.hbm [resolvable:$true] %s20
      %s22 = sshll.u32 [#allocation2], 4
      %s23 = int_to_ptr.vmem [resolvable:$true] %s22
      %28 = dma.hbm_to_vmem [thread:$0]  %s21, 1024, %s23, [#allocation3], 64, 64, 4
    $region9: #{forward.1} parent=1 // pred_fallthru
      _
    // Predicated region
    $region10: #{forward.1} parent=1 // pred_check
      _
    $region11: #{forward.1} parent=1 // pred_check_branch
      %30 = sbr.rel (0) target = $region13
    $region12: #{forward.1} parent=1 // pred_region
      _
    $region13: #{forward.1} parent=1 // pred_fallthru
      _
    // Predicated region
    $region14: #{forward.1} parent=1 // pred_check
      _
    $region15: #{forward.1} parent=1 // pred_check_branch
      %32 = sbr.rel (0) target = $region17
    $region16: #{forward.1} parent=1 // pred_region
      %34 = vsyncadd [#allocation5], 0
      %s35 = sshll.u32 %s3, 4
      %s36 = int_to_ptr.hbm [resolvable:$true] %s35
      %s37 = sshll.u32 [#allocation4], 4
      %s38 = int_to_ptr.vmem [resolvable:$true] %s37
      %43 = dma.hbm_to_vmem [thread:$0]  %s36, 1024, %s38, [#allocation5], 64, 64, 4
    $region17: #{forward.1} parent=1 // pred_fallthru
      _
    // Predicated region
    $region18: #{forward.1} parent=1 // pred_check
      _
    $region19: #{forward.1} parent=1 // pred_check_branch
      %45 = sbr.rel (0) target = $region21
    $region20: #{forward.1} parent=1 // pred_region
      _
    $region21: #{forward.1} parent=1 // pred_fallthru
      _
    // Predicated region
    $region22: #{forward.1} parent=1 // pred_check
      _
    $region23: #{forward.1} parent=1 // pred_check_branch
      %47 = sbr.rel (0) target = $region25
    $region24: #{forward.1} parent=1 // pred_region
      %49 = vsyncadd [#allocation5], 0
      %s50 = sshll.u32 %s5, 4
      %s51 = int_to_ptr.hbm [resolvable:$true] %s50
      %s52 = sshll.u32 [#allocation6], 4
      %s53 = int_to_ptr.vmem [resolvable:$true] %s52
      %58 = dma.hbm_to_vmem [thread:$0]  %s51, 1024, %s53, [#allocation5], 64, 64, 4
    $region25: #{forward.1} parent=1 // pred_fallthru
      _
    // Predicated region
    $region26: #{forward.1} parent=1 // pred_check
      _
    $region27: #{forward.1} parent=1 // pred_check_branch
      %60 = sbr.rel (0) target = $region29
    $region28: #{forward.1} parent=1 // pred_region
      _
    $region29: #{forward.1} parent=1 // pred_fallthru
      _
    // Predicated region
    $region30: #{forward.1} parent=1 // pred_check
      _
    $region31: #{forward.1} parent=1 // pred_check_branch
      %62 = sbr.rel (0) target = $region33
    $region32: #{forward.1} parent=1 // pred_region
      %64 = dma.done [#allocation3], 1024
    $region33: #{forward.1} parent=1 // pred_fallthru
      _
    // Predicated region
    $region34: #{forward.1} parent=1 // pred_check
      _
    $region35: #{forward.1} parent=1 // pred_check_branch
      %66 = sbr.rel (0) target = $region37
    $region36: #{forward.1} parent=1 // pred_region
      %68 = dma.done [#allocation5], 1024
    $region37: #{forward.1} parent=1 // pred_fallthru
      _
    // Predicated region
    $region38: #{forward.1} parent=1 // pred_check
      _
    $region39: #{forward.1} parent=1 // pred_check_branch
      %70 = sbr.rel (0) target = $region41
    $region40: #{forward.1} parent=1 // pred_region
      %72 = dma.done [#allocation5], 1024
    $region41: #{forward.1} parent=1 // pred_fallthru
      _
    %v73 = vld [vmem:[%s0] sm:$0xf]
    %v74 = vld [vmem:[%s0 + $0x4] sm:$0xf]
    %v75 = vld [vmem:[#allocation2] sm:$0xf]
    %v76 = vld [vmem:[#allocation2 + $0x4] sm:$0xf]
    %v77 = vld [vmem:[#allocation2 + $0x8] sm:$0xf]
    %v78 = vld [vmem:[#allocation2 + $0xc] sm:$0xf]
    %v79 = vld [vmem:[#allocation2 + $0x10] sm:$0xf]
    %v80 = vld [vmem:[#allocation2 + $0x14] sm:$0xf]
    %v81 = vld [vmem:[#allocation2 + $0x18] sm:$0xf]
    %v82 = vld [vmem:[#allocation2 + $0x1c] sm:$0xf]
    %v83 = vld [vmem:[#allocation2 + $0x20] sm:$0xf]
    %v84 = vld [vmem:[#allocation2 + $0x24] sm:$0xf]
    %v85 = vld [vmem:[#allocation2 + $0x28] sm:$0xf]
    %v86 = vld [vmem:[#allocation2 + $0x2c] sm:$0xf]
    %v87 = vld [vmem:[#allocation2 + $0x30] sm:$0xf]
    %v88 = vld [vmem:[#allocation2 + $0x34] sm:$0xf]
    %v89 = vld [vmem:[#allocation2 + $0x38] sm:$0xf]
    %v90 = vld [vmem:[#allocation2 + $0x3c] sm:$0xf]
    %v91 = vld [vmem:[%s2] sm:$0x1]
    %v93 = vperm.slane %v91, 0
    %v97 = vunpack.c.l.b16 %v73
    %v98 = vunpack.c.l.b16 %v74
    %v99 = vpack.c.b16 %v98, %v97
    %v117 = vunpack.c.l.b16 %v75
    %v118 = vunpack.c.l.b16 %v76
    %v119 = vunpack.c.l.b16 %v77
    %v120 = vunpack.c.l.b16 %v78
    %v121 = vunpack.c.l.b16 %v79
    %v122 = vunpack.c.l.b16 %v80
    %v123 = vunpack.c.l.b16 %v81
    %v124 = vunpack.c.l.b16 %v82
    %v125 = vunpack.c.l.b16 %v83
    %v126 = vunpack.c.l.b16 %v84
    %v127 = vunpack.c.l.b16 %v85
    %v128 = vunpack.c.l.b16 %v86
    %v129 = vunpack.c.l.b16 %v87
    %v130 = vunpack.c.l.b16 %v88
    %v131 = vunpack.c.l.b16 %v89
    %v132 = vunpack.c.l.b16 %v90
    %v133 = vpack.c.b16 %v118, %v117
    %v134 = vpack.c.b16 %v120, %v119
    %v135 = vpack.c.b16 %v122, %v121
    %v136 = vpack.c.b16 %v124, %v123
    %v137 = vpack.c.b16 %v126, %v125
    %v138 = vpack.c.b16 %v128, %v127
    %v139 = vpack.c.b16 %v130, %v129
    %v140 = vpack.c.b16 %v132, %v131
    %149 = vmatpush.bf16.msra.mxu0 %v140
    %150 = vmatpush.bf16.msra.mxu0 %v139
    %151 = vmatpush.bf16.msra.mxu0 %v138
    %152 = vmatpush.bf16.msra.mxu0 %v137
    %153 = vmatpush.bf16.msra.mxu0 %v136
    %154 = vmatpush.bf16.msra.mxu0 %v135
    %155 = vmatpush.bf16.msra.mxu0 %v134
    %156 = vmatpush.bf16.msra.mxu0 %v133
    %157 = vmatmul.bf16.gmra.mxu0 %v99
    %v158 = vpop.f32.mrf.mxu0
    %v159 = vadd.f32 %v93, %v158
    %v160 = vpop.f32.mrf.mxu0
    %v161 = vadd.f32 %v93, %v160
    %162 = vdwg.mxu0
    %v163 = vmax.f32 %v159, 0.0
    %v164 = vmax.f32 %v161, 0.0
    %v165 = vpack.c.bf16 %v164, %v163
    %v166 = vld [vmem:[#allocation4] sm:$0xf]
    %v167 = vld [vmem:[#allocation4 + $0x4] sm:$0xf]
    %v168 = vld [vmem:[#allocation4 + $0x8] sm:$0xf]
    %v169 = vld [vmem:[#allocation4 + $0xc] sm:$0xf]
    %v170 = vld [vmem:[#allocation4 + $0x10] sm:$0xf]
    %v171 = vld [vmem:[#allocation4 + $0x14] sm:$0xf]
    %v172 = vld [vmem:[#allocation4 + $0x18] sm:$0xf]
    %v173 = vld [vmem:[#allocation4 + $0x1c] sm:$0xf]
    %v174 = vld [vmem:[#allocation4 + $0x20] sm:$0xf]
    %v175 = vld [vmem:[#allocation4 + $0x24] sm:$0xf]
    %v176 = vld [vmem:[#allocation4 + $0x28] sm:$0xf]
    %v177 = vld [vmem:[#allocation4 + $0x2c] sm:$0xf]
    %v178 = vld [vmem:[#allocation4 + $0x30] sm:$0xf]
    %v179 = vld [vmem:[#allocation4 + $0x34] sm:$0xf]
    %v180 = vld [vmem:[#allocation4 + $0x38] sm:$0xf]
    %v181 = vld [vmem:[#allocation4 + $0x3c] sm:$0xf]
    %v182 = vld [vmem:[%s4] sm:$0x1]
    %v184 = vperm.slane %v182, 0
    %v202 = vunpack.c.l.b16 %v166
    %v203 = vunpack.c.l.b16 %v167
    %v204 = vunpack.c.l.b16 %v168
    %v205 = vunpack.c.l.b16 %v169
    %v206 = vunpack.c.l.b16 %v170
    %v207 = vunpack.c.l.b16 %v171
    %v208 = vunpack.c.l.b16 %v172
    %v209 = vunpack.c.l.b16 %v173
    %v210 = vunpack.c.l.b16 %v174
    %v211 = vunpack.c.l.b16 %v175
    %v212 = vunpack.c.l.b16 %v176
    %v213 = vunpack.c.l.b16 %v177
    %v214 = vunpack.c.l.b16 %v178
    %v215 = vunpack.c.l.b16 %v179
    %v216 = vunpack.c.l.b16 %v180
    %v217 = vunpack.c.l.b16 %v181
    %v218 = vpack.c.b16 %v203, %v202
    %v219 = vpack.c.b16 %v205, %v204
    %v220 = vpack.c.b16 %v207, %v206
    %v221 = vpack.c.b16 %v209, %v208
    %v222 = vpack.c.b16 %v211, %v210
    %v223 = vpack.c.b16 %v213, %v212
    %v224 = vpack.c.b16 %v215, %v214
    %v225 = vpack.c.b16 %v217, %v216
    %234 = vmatpush.bf16.msra.mxu0 %v225
    %235 = vmatpush.bf16.msra.mxu0 %v224
    %236 = vmatpush.bf16.msra.mxu0 %v223
    %237 = vmatpush.bf16.msra.mxu0 %v222
    %238 = vmatpush.bf16.msra.mxu0 %v221
    %239 = vmatpush.bf16.msra.mxu0 %v220
    %240 = vmatpush.bf16.msra.mxu0 %v219
    %241 = vmatpush.bf16.msra.mxu0 %v218
    %242 = vmatmul.bf16.gmra.mxu0 %v165
    %v243 = vpop.f32.mrf.mxu0
    %v244 = vadd.f32 %v184, %v243
    %v245 = vpop.f32.mrf.mxu0
    %v246 = vadd.f32 %v184, %v245
    %247 = vdwg.mxu0
    %v248 = vmax.f32 %v244, 0.0
    %v249 = vmax.f32 %v246, 0.0
    %v250 = vpack.c.bf16 %v249, %v248
    %v251 = vld [vmem:[#allocation6] sm:$0xf]
    %v252 = vld [vmem:[#allocation6 + $0x4] sm:$0xf]
    %v253 = vld [vmem:[#allocation6 + $0x8] sm:$0xf]
    %v254 = vld [vmem:[#allocation6 + $0xc] sm:$0xf]
    %v255 = vld [vmem:[#allocation6 + $0x10] sm:$0xf]
    %v256 = vld [vmem:[#allocation6 + $0x14] sm:$0xf]
    %v257 = vld [vmem:[#allocation6 + $0x18] sm:$0xf]
    %v258 = vld [vmem:[#allocation6 + $0x1c] sm:$0xf]
    %v259 = vld [vmem:[#allocation6 + $0x20] sm:$0xf]
    %v260 = vld [vmem:[#allocation6 + $0x24] sm:$0xf]
    %v261 = vld [vmem:[#allocation6 + $0x28] sm:$0xf]
    %v262 = vld [vmem:[#allocation6 + $0x2c] sm:$0xf]
    %v263 = vld [vmem:[#allocation6 + $0x30] sm:$0xf]
    %v264 = vld [vmem:[#allocation6 + $0x34] sm:$0xf]
    %v265 = vld [vmem:[#allocation6 + $0x38] sm:$0xf]
    %v266 = vld [vmem:[#allocation6 + $0x3c] sm:$0xf]
    %v267 = vld [vmem:[%s6] sm:$0x1]
    %v269 = vperm.slane %v267, 0
    %v287 = vunpack.c.l.b16 %v251
    %v288 = vunpack.c.l.b16 %v252
    %v289 = vunpack.c.l.b16 %v253
    %v290 = vunpack.c.l.b16 %v254
    %v291 = vunpack.c.l.b16 %v255
    %v292 = vunpack.c.l.b16 %v256
    %v293 = vunpack.c.l.b16 %v257
    %v294 = vunpack.c.l.b16 %v258
    %v295 = vunpack.c.l.b16 %v259
    %v296 = vunpack.c.l.b16 %v260
    %v297 = vunpack.c.l.b16 %v261
    %v298 = vunpack.c.l.b16 %v262
    %v299 = vunpack.c.l.b16 %v263
    %v300 = vunpack.c.l.b16 %v264
    %v301 = vunpack.c.l.b16 %v265
    %v302 = vunpack.c.l.b16 %v266
    %v303 = vpack.c.b16 %v288, %v287
    %v304 = vpack.c.b16 %v290, %v289
    %v305 = vpack.c.b16 %v292, %v291
    %v306 = vpack.c.b16 %v294, %v293
    %v307 = vpack.c.b16 %v296, %v295
    %v308 = vpack.c.b16 %v298, %v297
    %v309 = vpack.c.b16 %v300, %v299
    %v310 = vpack.c.b16 %v302, %v301
    %319 = vmatpush.bf16.msra.mxu0 %v310
    %320 = vmatpush.bf16.msra.mxu0 %v309
    %321 = vmatpush.bf16.msra.mxu0 %v308
    %322 = vmatpush.bf16.msra.mxu0 %v307
    %323 = vmatpush.bf16.msra.mxu0 %v306
    %324 = vmatpush.bf16.msra.mxu0 %v305
    %325 = vmatpush.bf16.msra.mxu0 %v304
    %326 = vmatpush.bf16.msra.mxu0 %v303
    %327 = vmatmul.bf16.gmra.mxu0 %v250
    %v328 = vpop.f32.mrf.mxu0
    %v329 = vadd.f32 %v269, %v328
    %v330 = vpop.f32.mrf.mxu0
    %v331 = vadd.f32 %v269, %v330
    %332 = vdwg.mxu0
    %333 = vst [vmem:[%s7] sm:$0xff] %v329
    %334 = vst [vmem:[%s7 + $0x8] sm:$0xff] %v331
    // Predicated region
    $region42: #{forward.1} parent=1 // pred_check
      _
    $region43: #{forward.1} parent=1 // pred_check_branch
      %336 = sbr.rel (0) target = $region45
    $region44: #{forward.1} parent=1 // pred_region
      _
    $region45: #{forward.1} parent=1 // pred_fallthru
      _
    // Predicated region
    $region46: #{forward.1} parent=1 // pred_check
      _
    $region47: #{forward.1} parent=1 // pred_check_branch
      %338 = sbr.rel (0) target = $region49
    $region48: #{forward.1} parent=1 // pred_region
      _
    $region49: #{forward.1} parent=1 // pred_fallthru
      _
    %339 = vsyncpa [#allocation3], 1
    %340 = vsyncpa [#allocation5], 1

</llo_original>
